<compile_context>
chip_gen: v7x
topology: tpu7x:2x2x1
jax: 0.10.0
libtpu: 0.0.40
codegen_flags: <defaults>
</compile_context>

<pallas_src>
import functools

import jax
import jax.numpy as jnp
from jax.experimental import pallas as pl
from jax.experimental.pallas import tpu as pltpu


def _round_up(v: int, m: int) -> int:
    return (v + m - 1) // m * m


def _gcn_fused_kernel(x_ref, adj_ref, w_ref, o_ref, *, layer_dims, compute_dtype):
    """Fused 4-layer GCN forward: all matmuls + ReLU in one VMEM-resident body.

    x_ref:   [N_pad, F_pad]  padded node features (f32)
    adj_ref: [N_pad, N_pad]  padded row-normalized adjacency (f32)
    w_ref:   [L, F_pad, F_pad] stacked zero-padded layer weights (f32)
    o_ref:   [N_pad, F_pad]  padded output (f32)
    """
    adj = adj_ref[...].astype(compute_dtype)   # cast once for the MXU
    h = x_ref[...]                             # f32 activations

    for layer, (f_in, f_out) in enumerate(layer_dims):
        w = w_ref[layer].astype(compute_dtype)  # static index -> [F_pad, F_pad]
        if f_in <= f_out:
            # Aggregate first: the big N^2 matmul runs at the narrower width.
            agg = jnp.dot(adj, h.astype(compute_dtype),
                          preferred_element_type=jnp.float32)
            h = jnp.dot(agg.astype(compute_dtype), w,
                        preferred_element_type=jnp.float32)
        else:
            # Transform first: adj @ (h @ W).
            support = jnp.dot(h.astype(compute_dtype), w,
                              preferred_element_type=jnp.float32)
            h = jnp.dot(adj, support.astype(compute_dtype),
                        preferred_element_type=jnp.float32)
        if layer == 0:
            h = jnp.maximum(h, 0.0)  # ReLU in f32 (safe on v5e: no bf16 VPU)
        # TODO(synk): F.dropout with training=True would need a pltpu.prng_*
        # mask; in inference (training=False) dropout is the identity.

    o_ref[...] = h  # already f32, lane-dense (F_pad multiple of 128)


def gcn_forward(x, adj, params, dropout_rate=0.0, *, compute_dtype=jnp.float32):
    """Full GCN forward pass (inference mode) as one fused Pallas kernel.

    compute_dtype=jnp.bfloat16 feeds the MXU with bf16 inputs (f32 accumulate),
    which roughly doubles MXU throughput / halves VMEM read traffic on v6e/v7x.
    """
    n, nfeat = x.shape
    nout = params[-1].shape[1]
    num_layers = len(params)

    # Pad: rows to a sublane multiple, features to lane-dense 128 multiples.
    n_pad = _round_up(n, 8)
    f_pad = _round_up(max([nfeat] + [int(w.shape[1]) for w in params] +
                          [int(w.shape[0]) for w in params]), 128)

    x_p = jnp.pad(x.astype(jnp.float32), ((0, n_pad - n), (0, f_pad - nfeat)))
    adj_p = jnp.pad(adj.astype(jnp.float32), ((0, n_pad - n), (0, n_pad - n)))
    w_p = jnp.stack([
        jnp.pad(w.astype(jnp.float32),
                ((0, f_pad - w.shape[0]), (0, f_pad - w.shape[1])))
        for w in params
    ])  # [L, F_pad, F_pad]

    layer_dims = tuple((int(w.shape[0]), int(w.shape[1])) for w in params)
    kernel = functools.partial(_gcn_fused_kernel,
                               layer_dims=layer_dims,
                               compute_dtype=compute_dtype)

    out_p = pl.pallas_call(
        kernel,
        out_shape=jax.ShapeDtypeStruct((n_pad, f_pad), jnp.float32),
        grid_spec=pl.GridSpec(
            grid=(1,),
            in_specs=[
                pl.BlockSpec((n_pad, f_pad), lambda i: (0, 0)),               # x
                pl.BlockSpec((n_pad, n_pad), lambda i: (0, 0)),               # adj
                pl.BlockSpec((num_layers, f_pad, f_pad), lambda i: (0, 0, 0)),  # W stack
            ],
            out_specs=pl.BlockSpec((n_pad, f_pad), lambda i: (0, 0)),
        ),
        compiler_params=pltpu.CompilerParams(
            dimension_semantics=("arbitrary",),
            # Explicit budget; safe on v7x (64 MiB physical) as well as v5e/v6e.
            vmem_limit_bytes=32 * 1024 * 1024,
        ),
    )(x_p, adj_p, w_p)

    return out_p[:n, :nout]


def init_gcn_params(key, nfeat, nhid, noutput):
    """Deterministic pygcn-style init: U(-stdv, stdv), stdv = 1/sqrt(fan_out)."""
    shapes = [(nfeat, nhid), (nhid, noutput), (noutput, noutput), (noutput, noutput)]
    params = []
    for i, (fi, fo) in enumerate(shapes):
        k = jax.random.fold_in(key, i)
        stdv = 1.0 / jnp.sqrt(jnp.float32(fo))
        params.append(
            jax.random.uniform(k, (fi, fo), jnp.float32, minval=-stdv, maxval=stdv)
        )
    return tuple(params)


if __name__ == "__main__":
    # Small shapes consistent with the module: N graph nodes, feature dims.
    N, NFEAT, NHID, NOUT = 8, 32, 64, 32
    DROPOUT = 0.5  # identity at inference

    key = jax.random.PRNGKey(0)
    kx, kadj, kp = jax.random.split(key, 3)

    x = jax.random.normal(kx, (N, NFEAT), dtype=jnp.float32)

    # Symmetric, row-normalized adjacency with self-loops (typical GCN input).
    a = jax.random.uniform(kadj, (N, N), dtype=jnp.float32)
    a = (a + a.T) * 0.5 + jnp.eye(N, dtype=jnp.float32)
    adj = a / jnp.sum(a, axis=1, keepdims=True)

    params = init_gcn_params(kp, NFEAT, NHID, NOUT)

    # f32 path (tight check).
    out = gcn_forward(x, adj, params, DROPOUT)
    jax.block_until_ready(out)

    # Plain-JAX reference of the same math.
    ref = jnp.maximum(adj @ (x @ params[0]), 0.0)
    ref = adj @ (ref @ params[1])
    ref = adj @ (ref @ params[2])
    ref = adj @ (ref @ params[3])
    assert out.shape == (N, NOUT)
    assert jnp.allclose(out, ref, atol=1e-4, rtol=1e-4), float(
        jnp.max(jnp.abs(out - ref)))

    # bf16 MXU-input path (v6e/v7x optimization), f32 accumulation -> loose check.
    out_bf16 = gcn_forward(x, adj, params, DROPOUT, compute_dtype=jnp.bfloat16)
    jax.block_until_ready(out_bf16)
    assert out_bf16.shape == (N, NOUT)
    assert jnp.allclose(out_bf16, ref, atol=1e-2, rtol=1e-1)

    print("KERNEL_OK")
</pallas_src>

<mosaic_0001>
module attributes {stable_mosaic.version = 11 : i64} {
  func.func @_gcn_fused_kernel(%arg0: i32, %arg1: memref<8x128xf32, #tpu.memory_space<vmem>>, %arg2: memref<8x8xf32, #tpu.memory_space<vmem>>, %arg3: memref<4x128x128xf32, #tpu.memory_space<vmem>>, %arg4: memref<8x128xf32, #tpu.memory_space<vmem>>) attributes {dimension_semantics = [#tpu.dimension_semantics<arbitrary>], iteration_bounds = array<i64: 1>, scalar_prefetch = 0 : i64, scratch_operands = 0 : i64, tpu.core_type = #tpu.core_type<tc>, window_params = [{pipeline_mode = #tpu.pipeline_mode<synchronous>, transform_indices = @transform_0, window_bounds = array<i64: 8, 128>}, {pipeline_mode = #tpu.pipeline_mode<synchronous>, transform_indices = @transform_1, window_bounds = array<i64: 8, 8>}, {pipeline_mode = #tpu.pipeline_mode<synchronous>, transform_indices = @transform_2, window_bounds = array<i64: 4, 128, 128>}, {pipeline_mode = #tpu.pipeline_mode<synchronous>, transform_indices = @transform_3, window_bounds = array<i64: 8, 128>}]} {
    %c0 = arith.constant 0 : index
    %c0_0 = arith.constant 0 : index
    %0 = vector.load %arg2[%c0, %c0_0] : memref<8x8xf32, #tpu.memory_space<vmem>>, vector<8x8xf32>
    %c0_1 = arith.constant 0 : index
    %c0_2 = arith.constant 0 : index
    %1 = vector.load %arg1[%c0_1, %c0_2] : memref<8x128xf32, #tpu.memory_space<vmem>>, vector<8x128xf32>
    %c0_3 = arith.constant 0 : index
    %c0_4 = arith.constant 0 : index
    %c0_5 = arith.constant 0 : index
    %2 = vector.load %arg3[%c0_3, %c0_4, %c0_5] : memref<4x128x128xf32, #tpu.memory_space<vmem>>, vector<1x128x128xf32>
    %3 = vector.shape_cast %2 : vector<1x128x128xf32> to vector<128x128xf32>
    %cst = arith.constant dense<0.000000e+00> : vector<8x128xf32>
    %4 = tpu.matmul %0, %1, %cst {dimension_numbers = #tpu.dot_dimension_numbers<[1], [0], [0], [1], [0, 0, 1, 1], [], []>} : vector<8x8xf32>, vector<8x128xf32>, vector<8x128xf32> -> vector<8x128xf32>
    %cst_6 = arith.constant dense<0.000000e+00> : vector<8x128xf32>
    %5 = tpu.matmul %4, %3, %cst_6 {dimension_numbers = #tpu.dot_dimension_numbers<[1], [0], [0], [1], [0, 0, 1, 1], [], []>} : vector<8x128xf32>, vector<128x128xf32>, vector<8x128xf32> -> vector<8x128xf32>
    %cst_7 = arith.constant 0.000000e+00 : f32
    %6 = vector.broadcast %cst_7 : f32 to vector<8x128xf32>
    %7 = arith.maximumf %5, %6 : vector<8x128xf32>
    %c1 = arith.constant 1 : index
    %c0_8 = arith.constant 0 : index
    %c0_9 = arith.constant 0 : index
    %8 = vector.load %arg3[%c1, %c0_8, %c0_9] : memref<4x128x128xf32, #tpu.memory_space<vmem>>, vector<1x128x128xf32>
    %9 = vector.shape_cast %8 : vector<1x128x128xf32> to vector<128x128xf32>
    %cst_10 = arith.constant dense<0.000000e+00> : vector<8x128xf32>
    %10 = tpu.matmul %7, %9, %cst_10 {dimension_numbers = #tpu.dot_dimension_numbers<[1], [0], [0], [1], [0, 0, 1, 1], [], []>} : vector<8x128xf32>, vector<128x128xf32>, vector<8x128xf32> -> vector<8x128xf32>
    %cst_11 = arith.constant dense<0.000000e+00> : vector<8x128xf32>
    %11 = tpu.matmul %0, %10, %cst_11 {dimension_numbers = #tpu.dot_dimension_numbers<[1], [0], [0], [1], [0, 0, 1, 1], [], []>} : vector<8x8xf32>, vector<8x128xf32>, vector<8x128xf32> -> vector<8x128xf32>
    %c2 = arith.constant 2 : index
    %c0_12 = arith.constant 0 : index
    %c0_13 = arith.constant 0 : index
    %12 = vector.load %arg3[%c2, %c0_12, %c0_13] : memref<4x128x128xf32, #tpu.memory_space<vmem>>, vector<1x128x128xf32>
    %13 = vector.shape_cast %12 : vector<1x128x128xf32> to vector<128x128xf32>
    %cst_14 = arith.constant dense<0.000000e+00> : vector<8x128xf32>
    %14 = tpu.matmul %0, %11, %cst_14 {dimension_numbers = #tpu.dot_dimension_numbers<[1], [0], [0], [1], [0, 0, 1, 1], [], []>} : vector<8x8xf32>, vector<8x128xf32>, vector<8x128xf32> -> vector<8x128xf32>
    %cst_15 = arith.constant dense<0.000000e+00> : vector<8x128xf32>
    %15 = tpu.matmul %14, %13, %cst_15 {dimension_numbers = #tpu.dot_dimension_numbers<[1], [0], [0], [1], [0, 0, 1, 1], [], []>} : vector<8x128xf32>, vector<128x128xf32>, vector<8x128xf32> -> vector<8x128xf32>
    %c3 = arith.constant 3 : index
    %c0_16 = arith.constant 0 : index
    %c0_17 = arith.constant 0 : index
    %16 = vector.load %arg3[%c3, %c0_16, %c0_17] : memref<4x128x128xf32, #tpu.memory_space<vmem>>, vector<1x128x128xf32>
    %17 = vector.shape_cast %16 : vector<1x128x128xf32> to vector<128x128xf32>
    %cst_18 = arith.constant dense<0.000000e+00> : vector<8x128xf32>
    %18 = tpu.matmul %0, %15, %cst_18 {dimension_numbers = #tpu.dot_dimension_numbers<[1], [0], [0], [1], [0, 0, 1, 1], [], []>} : vector<8x8xf32>, vector<8x128xf32>, vector<8x128xf32> -> vector<8x128xf32>
    %cst_19 = arith.constant dense<0.000000e+00> : vector<8x128xf32>
    %19 = tpu.matmul %18, %17, %cst_19 {dimension_numbers = #tpu.dot_dimension_numbers<[1], [0], [0], [1], [0, 0, 1, 1], [], []>} : vector<8x128xf32>, vector<128x128xf32>, vector<8x128xf32> -> vector<8x128xf32>
    %c0_20 = arith.constant 0 : index
    %c0_21 = arith.constant 0 : index
    %20 = vector.load %arg4[%c0_20, %c0_21] : memref<8x128xf32, #tpu.memory_space<vmem>>, vector<8x128xf32>
    tpu.vector_store %arg4[%c0_20, %c0_21], %19 {strides = array<i32>} : memref<8x128xf32, #tpu.memory_space<vmem>>, vector<8x128xf32>,
    return
  }
  func.func @transform_0(%arg0: i32) -> (i32, i32) {
    %c0_i32 = arith.constant 0 : i32
    %c0_i32_0 = arith.constant 0 : i32
    %c0_i32_1 = arith.constant 0 : i32
    return %c0_i32, %c0_i32_0 : i32, i32
  }
  func.func @transform_1(%arg0: i32) -> (i32, i32) {
    %c0_i32 = arith.constant 0 : i32
    %c0_i32_0 = arith.constant 0 : i32
    %c0_i32_1 = arith.constant 0 : i32
    return %c0_i32, %c0_i32_0 : i32, i32
  }
  func.func @transform_2(%arg0: i32) -> (i32, i32, i32) {
    %c0_i32 = arith.constant 0 : i32
    %c0_i32_0 = arith.constant 0 : i32
    %c0_i32_1 = arith.constant 0 : i32
    %c0_i32_2 = arith.constant 0 : i32
    return %c0_i32, %c0_i32_0, %c0_i32_1 : i32, i32, i32
  }
  func.func @transform_3(%arg0: i32) -> (i32, i32) {
    %c0_i32 = arith.constant 0 : i32
    %c0_i32_0 = arith.constant 0 : i32
    %c0_i32_1 = arith.constant 0 : i32
    return %c0_i32, %c0_i32_0 : i32, i32
  }
}

</mosaic_0001>

<llo_original>
// kernel: tpu_custom_call.1
$region0: #{tpu_custom_call.1}
  #allocation0 [shape = 'u32[]', space=smem, size = 0x4, offset = 0x4, fixed_abs, tag = 'smem constant byte address 0x4 - core index']
  #allocation1 [shape = 'u32[144,128]{1,0:T(1,128)}', space=vmem, size = 0x12000, scoped, tag = 'internal scratch']
  %s0 = inlined_call_operand.hbm [shape: f32[8,128], index: 0, kind: input, shape index: {}]
  %s1 = inlined_call_operand.hbm [shape: f32[8,8], index: 1, kind: input, shape index: {}]
  %s2 = inlined_call_operand.hbm [shape: f32[4,128,128], index: 2, kind: input, shape index: {}]
  %s3 = inlined_call_operand.hbm [shape: f32[8,128], index: 3, kind: output, shape index: {}]
  %s4 = sld [smem:[#allocation0]]
  $region34: #{tpu_custom_call.1} parent=0
    _
  %s6 = ssub.s32 1, %s4
  %s7 = scalar_select 0, %s6, %s4
  $region1: #{tpu_custom_call.1} parent=0
    #allocation2 [shape = 'u8[4096]{0}', space=vmem, size = 0x1000, scoped, tag = 'input window, operand 0, single buffered']
    #allocation3 [shape = 's32[1]{0}', space=sflag, size = 0x4, scoped, tag = 'scoped memory for tpu_custom_call.1']
    #allocation4 [shape = 's32[1]{0}', space=sflag, size = 0x4, scoped, tag = 'scoped memory for tpu_custom_call.1']
    #allocation5 [shape = 'u8[4096]{0}', space=vmem, size = 0x1000, scoped, tag = 'input window, operand 1, single buffered']
    #allocation6 [shape = 's32[1]{0}', space=sflag, size = 0x4, scoped, tag = 'scoped memory for tpu_custom_call.1']
    #allocation7 [shape = 'u8[262144]{0}', space=vmem, size = 0x40000, scoped, tag = 'input window, operand 2, single buffered']
    #allocation8 [shape = 'u8[4096]{0}', space=vmem, size = 0x1000, scoped, tag = 'output window, operand 0, single buffered']
    %8 = vsyncpa [#allocation3], 0
    %9 = vsyncpa [#allocation6], 0
    %10 = vsyncpa [#allocation4], 0
    // Predicated region
    $region2: #{tpu_custom_call.1} parent=1 // pred_check
      _
    $region3: #{tpu_custom_call.1} parent=1 // pred_check_branch
      %12 = sbr.rel (0) target = $region5
    $region4: #{tpu_custom_call.1} parent=1 // pred_region
      %s14 = ssub.s32 128, 128
      %15 = vsyncadd [#allocation3], %s14
      %s17 = sshll.u32 [#allocation2], 4
      %s18 = int_to_ptr.vmem [resolvable:$true] %s17
      %20 = dma.hbm_to_vmem [thread:$0]  %s0, 128, %s18, [#allocation3]
    $region5: #{tpu_custom_call.1} parent=1 // pred_fallthru
      _
    // Predicated region
    $region6: #{tpu_custom_call.1} parent=1 // pred_check
      _
    $region7: #{tpu_custom_call.1} parent=1 // pred_check_branch
      %22 = sbr.rel (0) target = $region9
    $region8: #{tpu_custom_call.1} parent=1 // pred_region
      %s24 = ssub.s32 128, 128
      %25 = vsyncadd [#allocation6], %s24
      %s27 = sshll.u32 [#allocation5], 4
      %s28 = int_to_ptr.vmem [resolvable:$true] %s27
      %30 = dma.hbm_to_vmem [thread:$0]  %s1, 128, %s28, [#allocation6]
    $region9: #{tpu_custom_call.1} parent=1 // pred_fallthru
      _
    // Predicated region
    $region10: #{tpu_custom_call.1} parent=1 // pred_check
      _
    $region11: #{tpu_custom_call.1} parent=1 // pred_check_branch
      %32 = sbr.rel (0) target = $region13
    $region12: #{tpu_custom_call.1} parent=1 // pred_region
      %s34 = ssub.s32 8192, 8192
      %35 = vsyncadd [#allocation6], %s34
      %s36 = sshll.u32 [#allocation7], 4
      %s37 = int_to_ptr.vmem [resolvable:$true] %s36
      %42 = dma.hbm_to_vmem [thread:$0]  %s2, 8192, %s37, [#allocation6], 128, 128, 8
    $region13: #{tpu_custom_call.1} parent=1 // pred_fallthru
      _
    // Predicated region
    $region14: #{tpu_custom_call.1} parent=1 // pred_check
      _
    $region15: #{tpu_custom_call.1} parent=1 // pred_check_branch
      %44 = sbr.rel (0) target = $region17
    $region16: #{tpu_custom_call.1} parent=1 // pred_region
      %45 = dma.done [#allocation3], 128
    $region17: #{tpu_custom_call.1} parent=1 // pred_fallthru
      _
    // Predicated region
    $region18: #{tpu_custom_call.1} parent=1 // pred_check
      _
    $region19: #{tpu_custom_call.1} parent=1 // pred_check_branch
      %47 = sbr.rel (0) target = $region21
    $region20: #{tpu_custom_call.1} parent=1 // pred_region
      %48 = dma.done [#allocation6], 128
    $region21: #{tpu_custom_call.1} parent=1 // pred_fallthru
      _
    // Predicated region
    $region22: #{tpu_custom_call.1} parent=1 // pred_check
      _
    $region23: #{tpu_custom_call.1} parent=1 // pred_check_branch
      %50 = sbr.rel (0) target = $region25
    $region24: #{tpu_custom_call.1} parent=1 // pred_region
      %51 = dma.done [#allocation6], 8192
    $region25: #{tpu_custom_call.1} parent=1 // pred_fallthru
      _
    %v52 = vld [vmem:[#allocation5] sm:$0xff]
    %v53 = vld [vmem:[#allocation2] sm:$0xff]
    %v54 = vld [vmem:[#allocation7] sm:$0xff]
    %v55 = vld [vmem:[#allocation7 + $0x8] sm:$0xff]
    %v56 = vld [vmem:[#allocation7 + $0x10] sm:$0xff]
    %v57 = vld [vmem:[#allocation7 + $0x18] sm:$0xff]
    %v58 = vld [vmem:[#allocation7 + $0x20] sm:$0xff]
    %v59 = vld [vmem:[#allocation7 + $0x28] sm:$0xff]
    %v60 = vld [vmem:[#allocation7 + $0x30] sm:$0xff]
    %v61 = vld [vmem:[#allocation7 + $0x38] sm:$0xff]
    %v62 = vld [vmem:[#allocation7 + $0x40] sm:$0xff]
    %v63 = vld [vmem:[#allocation7 + $0x48] sm:$0xff]
    %v64 = vld [vmem:[#allocation7 + $0x50] sm:$0xff]
    %v65 = vld [vmem:[#allocation7 + $0x58] sm:$0xff]
    %v66 = vld [vmem:[#allocation7 + $0x60] sm:$0xff]
    %v67 = vld [vmem:[#allocation7 + $0x68] sm:$0xff]
    %v68 = vld [vmem:[#allocation7 + $0x70] sm:$0xff]
    %v69 = vld [vmem:[#allocation7 + $0x78] sm:$0xff]
    %vm70 = vcmask 64512
    %v72 = vsel %vm70, %v52, 0
    %74 = vmatprep.subr.mxu0 0.0
    %75 = vmatpush1.msra.mxu0 %v53
    %76 = vmatprep.subr.mxu0 0.0
    %77 = vmatpush1.msra.mxu0 0.0
    %78 = vmatprep.subr.mxu0 0.0
    %79 = vmatpush1.msra.mxu0 0.0
    %80 = vmatprep.subr.mxu0 0.0
    %81 = vmatpush1.msra.mxu0 0.0
    %82 = vmatprep.subr.mxu0 0.0
    %83 = vmatpush1.msra.mxu0 0.0
    %84 = vmatprep.subr.mxu0 0.0
    %85 = vmatpush1.msra.mxu0 0.0
    %86 = vmatprep.subr.mxu0 0.0
    %87 = vmatpush1.msra.mxu0 0.0
    %88 = vmatprep.subr.mxu0 0.0
    %89 = vmatpush1.msra.mxu0 0.0
    %90 = vmatprep.subr.mxu0 0.0
    %91 = vmatpush1.msra.mxu0 0.0
    %92 = vmatprep.subr.mxu0 0.0
    %93 = vmatpush1.msra.mxu0 0.0
    %94 = vmatprep.subr.mxu0 0.0
    %95 = vmatpush1.msra.mxu0 0.0
    %96 = vmatprep.subr.mxu0 0.0
    %97 = vmatpush1.msra.mxu0 0.0
    %98 = vmatprep.subr.mxu0 0.0
    %99 = vmatpush1.msra.mxu0 0.0
    %100 = vmatprep.subr.mxu0 0.0
    %101 = vmatpush1.msra.mxu0 0.0
    %102 = vmatprep.subr.mxu0 0.0
    %103 = vmatpush1.msra.mxu0 0.0
    %104 = vmatprep.subr.mxu0 0.0
    %105 = vmatpush1.msra.mxu0 0.0
    %106 = vmatprep.subr.mxu0 0.0
    %107 = vmatpush1.msra.mxu0 0.0
    %108 = vmatprep.subr.mxu0 0.0
    %109 = vmatpush1.msra.mxu0 0.0
    %110 = vmatprep.subr.mxu0 0.0
    %111 = vmatpush1.msra.mxu0 0.0
    %112 = vmatprep.subr.mxu0 0.0
    %113 = vmatpush1.msra.mxu0 0.0
    %114 = vmatprep.subr.mxu0 0.0
    %115 = vmatpush1.msra.mxu0 0.0
    %116 = vmatprep.subr.mxu0 0.0
    %117 = vmatpush1.msra.mxu0 0.0
    %118 = vmatprep.subr.mxu0 0.0
    %119 = vmatpush1.msra.mxu0 0.0
    %120 = vmatprep.subr.mxu0 0.0
    %121 = vmatpush1.msra.mxu0 0.0
    %122 = vmatprep.subr.mxu0 0.0
    %123 = vmatpush1.msra.mxu0 0.0
    %124 = vmatprep.subr.mxu0 0.0
    %125 = vmatpush1.msra.mxu0 0.0
    %126 = vmatprep.subr.mxu0 0.0
    %127 = vmatpush1.msra.mxu0 0.0
    %128 = vmatprep.subr.mxu0 0.0
    %129 = vmatpush1.msra.mxu0 0.0
    %130 = vmatprep.subr.mxu0 0.0
    %131 = vmatpush1.msra.mxu0 0.0
    %132 = vmatprep.subr.mxu0 0.0
    %133 = vmatpush1.msra.mxu0 0.0
    %134 = vmatprep.subr.mxu0 0.0
    %135 = vmatpush1.msra.mxu0 0.0
    %136 = vmatprep.subr.mxu0 0.0
    %137 = vmatpush1.msra.mxu0 0.0
    %138 = vmatprep.mubr.f32.mxu0 0.0
    %139 = vmatmul.mubr.f32.gmra.mrb[0].mxu0 %v72
    %v140 = vpop.f32.mrb[0].mxu0
    %v141 = vadd.f32 0.0, %v140
    %v142 = vpop.f32.mrb[0].mxu0
    %143 = vdwg.mxu0
    %144 = vmatprep.subr.mxu0 0.0
    %145 = vmatpush1.msra.mxu0 %v54
    %146 = vmatprep.subr.mxu0 0.0
    %147 = vmatpush1.msra.mxu0 %v55
    %148 = vmatprep.subr.mxu0 0.0
    %149 = vmatpush1.msra.mxu0 %v56
    %150 = vmatprep.subr.mxu0 0.0
    %151 = vmatpush1.msra.mxu0 %v57
    %152 = vmatprep.subr.mxu0 0.0
    %153 = vmatpush1.msra.mxu0 %v58
    %154 = vmatprep.subr.mxu0 0.0
    %155 = vmatpush1.msra.mxu0 %v59
    %156 = vmatprep.subr.mxu0 0.0
    %157 = vmatpush1.msra.mxu0 %v60
    %158 = vmatprep.subr.mxu0 0.0
    %159 = vmatpush1.msra.mxu0 %v61
    %160 = vmatprep.subr.mxu0 0.0
    %161 = vmatpush1.msra.mxu0 %v62
    %162 = vmatprep.subr.mxu0 0.0
    %163 = vmatpush1.msra.mxu0 %v63
    %164 = vmatprep.subr.mxu0 0.0
    %165 = vmatpush1.msra.mxu0 %v64
    %166 = vmatprep.subr.mxu0 0.0
    %167 = vmatpush1.msra.mxu0 %v65
    %168 = vmatprep.subr.mxu0 0.0
    %169 = vmatpush1.msra.mxu0 %v66
    %170 = vmatprep.subr.mxu0 0.0
    %171 = vmatpush1.msra.mxu0 %v67
    %172 = vmatprep.subr.mxu0 0.0
    %173 = vmatpush1.msra.mxu0 %v68
    %174 = vmatprep.subr.mxu0 0.0
    %175 = vmatpush1.msra.mxu0 %v69
    %176 = vmatprep.subr.mxu0 0.0
    %177 = vmatpush1.msra.mxu0 0.0
    %178 = vmatprep.subr.mxu0 0.0
    %179 = vmatpush1.msra.mxu0 0.0
    %180 = vmatprep.subr.mxu0 0.0
    %181 = vmatpush1.msra.mxu0 0.0
    %182 = vmatprep.subr.mxu0 0.0
    %183 = vmatpush1.msra.mxu0 0.0
    %184 = vmatprep.subr.mxu0 0.0
    %185 = vmatpush1.msra.mxu0 0.0
    %186 = vmatprep.subr.mxu0 0.0
    %187 = vmatpush1.msra.mxu0 0.0
    %188 = vmatprep.subr.mxu0 0.0
    %189 = vmatpush1.msra.mxu0 0.0
    %190 = vmatprep.subr.mxu0 0.0
    %191 = vmatpush1.msra.mxu0 0.0
    %192 = vmatprep.subr.mxu0 0.0
    %193 = vmatpush1.msra.mxu0 0.0
    %194 = vmatprep.subr.mxu0 0.0
    %195 = vmatpush1.msra.mxu0 0.0
    %196 = vmatprep.subr.mxu0 0.0
    %197 = vmatpush1.msra.mxu0 0.0
    %198 = vmatprep.subr.mxu0 0.0
    %199 = vmatpush1.msra.mxu0 0.0
    %200 = vmatprep.subr.mxu0 0.0
    %201 = vmatpush1.msra.mxu0 0.0
    %202 = vmatprep.subr.mxu0 0.0
    %203 = vmatpush1.msra.mxu0 0.0
    %204 = vmatprep.subr.mxu0 0.0
    %205 = vmatpush1.msra.mxu0 0.0
    %206 = vmatprep.subr.mxu0 0.0
    %207 = vmatpush1.msra.mxu0 0.0
    %208 = vmatprep.mubr.f32.mxu0 0.0
    %209 = vmatmul.mubr.f32.gmra.mrb[0].mxu0 %v141
    %v210 = vpop.f32.mrb[0].mxu0
    %v211 = vadd.f32 0.0, %v210
    %v212 = vpop.f32.mrb[0].mxu0
    %213 = vdwg.mxu0
    %v214 = vmax.f32 %v211, 0.0
    %s215 = scalar_lea.vmem [#allocation7], 128
    %v216 = vld [vmem:[%s215] sm:$0xff]
    %v217 = vld [vmem:[%s215 + $0x8] sm:$0xff]
    %v218 = vld [vmem:[%s215 + $0x10] sm:$0xff]
    %v219 = vld [vmem:[%s215 + $0x18] sm:$0xff]
    %v220 = vld [vmem:[%s215 + $0x20] sm:$0xff]
    %v221 = vld [vmem:[%s215 + $0x28] sm:$0xff]
    %v222 = vld [vmem:[%s215 + $0x30] sm:$0xff]
    %v223 = vld [vmem:[%s215 + $0x38] sm:$0xff]
    %v224 = vld [vmem:[%s215 + $0x40] sm:$0xff]
    %v225 = vld [vmem:[%s215 + $0x48] sm:$0xff]
    %v226 = vld [vmem:[%s215 + $0x50] sm:$0xff]
    %v227 = vld [vmem:[%s215 + $0x58] sm:$0xff]
    %v228 = vld [vmem:[%s215 + $0x60] sm:$0xff]
    %v229 = vld [vmem:[%s215 + $0x68] sm:$0xff]
    %v230 = vld [vmem:[%s215 + $0x70] sm:$0xff]
    %v231 = vld [vmem:[%s215 + $0x78] sm:$0xff]
    %232 = vmatprep.subr.mxu0 0.0
    %233 = vmatpush1.msra.mxu0 %v216
    %234 = vmatprep.subr.mxu0 0.0
    %235 = vmatpush1.msra.mxu0 %v217
    %236 = vmatprep.subr.mxu0 0.0
    %237 = vmatpush1.msra.mxu0 %v218
    %238 = vmatprep.subr.mxu0 0.0
    %239 = vmatpush1.msra.mxu0 %v219
    %240 = vmatprep.subr.mxu0 0.0
    %241 = vmatpush1.msra.mxu0 %v220
    %242 = vmatprep.subr.mxu0 0.0
    %243 = vmatpush1.msra.mxu0 %v221
    %244 = vmatprep.subr.mxu0 0.0
    %245 = vmatpush1.msra.mxu0 %v222
    %246 = vmatprep.subr.mxu0 0.0
    %247 = vmatpush1.msra.mxu0 %v223
    %248 = vmatprep.subr.mxu0 0.0
    %249 = vmatpush1.msra.mxu0 %v224
    %250 = vmatprep.subr.mxu0 0.0
    %251 = vmatpush1.msra.mxu0 %v225
    %252 = vmatprep.subr.mxu0 0.0
    %253 = vmatpush1.msra.mxu0 %v226
    %254 = vmatprep.subr.mxu0 0.0
    %255 = vmatpush1.msra.mxu0 %v227
    %256 = vmatprep.subr.mxu0 0.0
    %257 = vmatpush1.msra.mxu0 %v228
    %258 = vmatprep.subr.mxu0 0.0
    %259 = vmatpush1.msra.mxu0 %v229
    %260 = vmatprep.subr.mxu0 0.0
    %261 = vmatpush1.msra.mxu0 %v230
    %262 = vmatprep.subr.mxu0 0.0
    %263 = vmatpush1.msra.mxu0 %v231
    %264 = vmatprep.subr.mxu0 0.0
    %265 = vmatpush1.msra.mxu0 0.0
    %266 = vmatprep.subr.mxu0 0.0
    %267 = vmatpush1.msra.mxu0 0.0
    %268 = vmatprep.subr.mxu0 0.0
    %269 = vmatpush1.msra.mxu0 0.0
    %270 = vmatprep.subr.mxu0 0.0
    %271 = vmatpush1.msra.mxu0 0.0
    %272 = vmatprep.subr.mxu0 0.0
    %273 = vmatpush1.msra.mxu0 0.0
    %274 = vmatprep.subr.mxu0 0.0
    %275 = vmatpush1.msra.mxu0 0.0
    %276 = vmatprep.subr.mxu0 0.0
    %277 = vmatpush1.msra.mxu0 0.0
    %278 = vmatprep.subr.mxu0 0.0
    %279 = vmatpush1.msra.mxu0 0.0
    %280 = vmatprep.subr.mxu0 0.0
    %281 = vmatpush1.msra.mxu0 0.0
    %282 = vmatprep.subr.mxu0 0.0
    %283 = vmatpush1.msra.mxu0 0.0
    %284 = vmatprep.subr.mxu0 0.0
    %285 = vmatpush1.msra.mxu0 0.0
    %286 = vmatprep.subr.mxu0 0.0
    %287 = vmatpush1.msra.mxu0 0.0
    %288 = vmatprep.subr.mxu0 0.0
    %289 = vmatpush1.msra.mxu0 0.0
    %290 = vmatprep.subr.mxu0 0.0
    %291 = vmatpush1.msra.mxu0 0.0
    %292 = vmatprep.subr.mxu0 0.0
    %293 = vmatpush1.msra.mxu0 0.0
    %294 = vmatprep.subr.mxu0 0.0
    %295 = vmatpush1.msra.mxu0 0.0
    %296 = vmatprep.mubr.f32.mxu0 0.0
    %297 = vmatmul.mubr.f32.gmra.mrb[0].mxu0 %v214
    %v298 = vpop.f32.mrb[0].mxu0
    %v299 = vadd.f32 0.0, %v298
    %v300 = vpop.f32.mrb[0].mxu0
    %301 = vdwg.mxu0
    %302 = vmatprep.subr.mxu0 0.0
    %303 = vmatpush1.msra.mxu0 %v299
    %304 = vmatprep.subr.mxu0 0.0
    %305 = vmatpush1.msra.mxu0 0.0
    %306 = vmatprep.subr.mxu0 0.0
    %307 = vmatpush1.msra.mxu0 0.0
    %308 = vmatprep.subr.mxu0 0.0
    %309 = vmatpush1.msra.mxu0 0.0
    %310 = vmatprep.subr.mxu0 0.0
    %311 = vmatpush1.msra.mxu0 0.0
    %312 = vmatprep.subr.mxu0 0.0
    %313 = vmatpush1.msra.mxu0 0.0
    %314 = vmatprep.subr.mxu0 0.0
    %315 = vmatpush1.msra.mxu0 0.0
    %316 = vmatprep.subr.mxu0 0.0
    %317 = vmatpush1.msra.mxu0 0.0
    %318 = vmatprep.subr.mxu0 0.0
    %319 = vmatpush1.msra.mxu0 0.0
    %320 = vmatprep.subr.mxu0 0.0
    %321 = vmatpush1.msra.mxu0 0.0
    %322 = vmatprep.subr.mxu0 0.0
    %323 = vmatpush1.msra.mxu0 0.0
    %324 = vmatprep.subr.mxu0 0.0
    %325 = vmatpush1.msra.mxu0 0.0
    %326 = vmatprep.subr.mxu0 0.0
    %327 = vmatpush1.msra.mxu0 0.0
    %328 = vmatprep.subr.mxu0 0.0
    %329 = vmatpush1.msra.mxu0 0.0
    %330 = vmatprep.subr.mxu0 0.0
    %331 = vmatpush1.msra.mxu0 0.0
    %332 = vmatprep.subr.mxu0 0.0
    %333 = vmatpush1.msra.mxu0 0.0
    %334 = vmatprep.subr.mxu0 0.0
    %335 = vmatpush1.msra.mxu0 0.0
    %336 = vmatprep.subr.mxu0 0.0
    %337 = vmatpush1.msra.mxu0 0.0
    %338 = vmatprep.subr.mxu0 0.0
    %339 = vmatpush1.msra.mxu0 0.0
    %340 = vmatprep.subr.mxu0 0.0
    %341 = vmatpush1.msra.mxu0 0.0
    %342 = vmatprep.subr.mxu0 0.0
    %343 = vmatpush1.msra.mxu0 0.0
    %344 = vmatprep.subr.mxu0 0.0
    %345 = vmatpush1.msra.mxu0 0.0
    %346 = vmatprep.subr.mxu0 0.0
    %347 = vmatpush1.msra.mxu0 0.0
    %348 = vmatprep.subr.mxu0 0.0
    %349 = vmatpush1.msra.mxu0 0.0
    %350 = vmatprep.subr.mxu0 0.0
    %351 = vmatpush1.msra.mxu0 0.0
    %352 = vmatprep.subr.mxu0 0.0
    %353 = vmatpush1.msra.mxu0 0.0
    %354 = vmatprep.subr.mxu0 0.0
    %355 = vmatpush1.msra.mxu0 0.0
    %356 = vmatprep.subr.mxu0 0.0
    %357 = vmatpush1.msra.mxu0 0.0
    %358 = vmatprep.subr.mxu0 0.0
    %359 = vmatpush1.msra.mxu0 0.0
    %360 = vmatprep.subr.mxu0 0.0
    %361 = vmatpush1.msra.mxu0 0.0
    %362 = vmatprep.subr.mxu0 0.0
    %363 = vmatpush1.msra.mxu0 0.0
    %364 = vmatprep.subr.mxu0 0.0
    %365 = vmatpush1.msra.mxu0 0.0
    %366 = vmatprep.mubr.f32.mxu0 0.0
    %367 = vmatmul.mubr.f32.gmra.mrb[0].mxu0 %v72
    %v368 = vpop.f32.mrb[0].mxu0
    %v369 = vadd.f32 0.0, %v368
    %v370 = vpop.f32.mrb[0].mxu0
    %371 = vdwg.mxu0
    %s372 = scalar_lea.vmem [#allocation7], 256
    %v373 = vld [vmem:[%s372] sm:$0xff]
    %v374 = vld [vmem:[%s372 + $0x8] sm:$0xff]
    %v375 = vld [vmem:[%s372 + $0x10] sm:$0xff]
    %v376 = vld [vmem:[%s372 + $0x18] sm:$0xff]
    %v377 = vld [vmem:[%s372 + $0x20] sm:$0xff]
    %v378 = vld [vmem:[%s372 + $0x28] sm:$0xff]
    %v379 = vld [vmem:[%s372 + $0x30] sm:$0xff]
    %v380 = vld [vmem:[%s372 + $0x38] sm:$0xff]
    %v381 = vld [vmem:[%s372 + $0x40] sm:$0xff]
    %v382 = vld [vmem:[%s372 + $0x48] sm:$0xff]
    %v383 = vld [vmem:[%s372 + $0x50] sm:$0xff]
    %v384 = vld [vmem:[%s372 + $0x58] sm:$0xff]
    %v385 = vld [vmem:[%s372 + $0x60] sm:$0xff]
    %v386 = vld [vmem:[%s372 + $0x68] sm:$0xff]
    %v387 = vld [vmem:[%s372 + $0x70] sm:$0xff]
    %v388 = vld [vmem:[%s372 + $0x78] sm:$0xff]
    %389 = vmatprep.subr.mxu0 0.0
    %390 = vmatpush1.msra.mxu0 %v369
    %391 = vmatprep.subr.mxu0 0.0
    %392 = vmatpush1.msra.mxu0 0.0
    %393 = vmatprep.subr.mxu0 0.0
    %394 = vmatpush1.msra.mxu0 0.0
    %395 = vmatprep.subr.mxu0 0.0
    %396 = vmatpush1.msra.mxu0 0.0
    %397 = vmatprep.subr.mxu0 0.0
    %398 = vmatpush1.msra.mxu0 0.0
    %399 = vmatprep.subr.mxu0 0.0
    %400 = vmatpush1.msra.mxu0 0.0
    %401 = vmatprep.subr.mxu0 0.0
    %402 = vmatpush1.msra.mxu0 0.0
    %403 = vmatprep.subr.mxu0 0.0
    %404 = vmatpush1.msra.mxu0 0.0
    %405 = vmatprep.subr.mxu0 0.0
    %406 = vmatpush1.msra.mxu0 0.0
    %407 = vmatprep.subr.mxu0 0.0
    %408 = vmatpush1.msra.mxu0 0.0
    %409 = vmatprep.subr.mxu0 0.0
    %410 = vmatpush1.msra.mxu0 0.0
    %411 = vmatprep.subr.mxu0 0.0
    %412 = vmatpush1.msra.mxu0 0.0
    %413 = vmatprep.subr.mxu0 0.0
    %414 = vmatpush1.msra.mxu0 0.0
    %415 = vmatprep.subr.mxu0 0.0
    %416 = vmatpush1.msra.mxu0 0.0
    %417 = vmatprep.subr.mxu0 0.0
    %418 = vmatpush1.msra.mxu0 0.0
    %419 = vmatprep.subr.mxu0 0.0
    %420 = vmatpush1.msra.mxu0 0.0
    %421 = vmatprep.subr.mxu0 0.0
    %422 = vmatpush1.msra.mxu0 0.0
    %423 = vmatprep.subr.mxu0 0.0
    %424 = vmatpush1.msra.mxu0 0.0
    %425 = vmatprep.subr.mxu0 0.0
    %426 = vmatpush1.msra.mxu0 0.0
    %427 = vmatprep.subr.mxu0 0.0
    %428 = vmatpush1.msra.mxu0 0.0
    %429 = vmatprep.subr.mxu0 0.0
    %430 = vmatpush1.msra.mxu0 0.0
    %431 = vmatprep.subr.mxu0 0.0
    %432 = vmatpush1.msra.mxu0 0.0
    %433 = vmatprep.subr.mxu0 0.0
    %434 = vmatpush1.msra.mxu0 0.0
    %435 = vmatprep.subr.mxu0 0.0
    %436 = vmatpush1.msra.mxu0 0.0
    %437 = vmatprep.subr.mxu0 0.0
    %438 = vmatpush1.msra.mxu0 0.0
    %439 = vmatprep.subr.mxu0 0.0
    %440 = vmatpush1.msra.mxu0 0.0
    %441 = vmatprep.subr.mxu0 0.0
    %442 = vmatpush1.msra.mxu0 0.0
    %443 = vmatprep.subr.mxu0 0.0
    %444 = vmatpush1.msra.mxu0 0.0
    %445 = vmatprep.subr.mxu0 0.0
    %446 = vmatpush1.msra.mxu0 0.0
    %447 = vmatprep.subr.mxu0 0.0
    %448 = vmatpush1.msra.mxu0 0.0
    %449 = vmatprep.subr.mxu0 0.0
    %450 = vmatpush1.msra.mxu0 0.0
    %451 = vmatprep.subr.mxu0 0.0
    %452 = vmatpush1.msra.mxu0 0.0
    %453 = vmatprep.mubr.f32.mxu0 0.0
    %454 = vmatmul.mubr.f32.gmra.mrb[0].mxu0 %v72
    %v455 = vpop.f32.mrb[0].mxu0
    %v456 = vadd.f32 0.0, %v455
    %v457 = vpop.f32.mrb[0].mxu0
    %458 = vdwg.mxu0
    %459 = vmatprep.subr.mxu0 0.0
    %460 = vmatpush1.msra.mxu0 %v373
    %461 = vmatprep.subr.mxu0 0.0
    %462 = vmatpush1.msra.mxu0 %v374
    %463 = vmatprep.subr.mxu0 0.0
    %464 = vmatpush1.msra.mxu0 %v375
    %465 = vmatprep.subr.mxu0 0.0
    %466 = vmatpush1.msra.mxu0 %v376
    %467 = vmatprep.subr.mxu0 0.0
    %468 = vmatpush1.msra.mxu0 %v377
    %469 = vmatprep.subr.mxu0 0.0
    %470 = vmatpush1.msra.mxu0 %v378
    %471 = vmatprep.subr.mxu0 0.0
    %472 = vmatpush1.msra.mxu0 %v379
    %473 = vmatprep.subr.mxu0 0.0
    %474 = vmatpush1.msra.mxu0 %v380
    %475 = vmatprep.subr.mxu0 0.0
    %476 = vmatpush1.msra.mxu0 %v381
    %477 = vmatprep.subr.mxu0 0.0
    %478 = vmatpush1.msra.mxu0 %v382
    %479 = vmatprep.subr.mxu0 0.0
    %480 = vmatpush1.msra.mxu0 %v383
    %481 = vmatprep.subr.mxu0 0.0
    %482 = vmatpush1.msra.mxu0 %v384
    %483 = vmatprep.subr.mxu0 0.0
    %484 = vmatpush1.msra.mxu0 %v385
    %485 = vmatprep.subr.mxu0 0.0
    %486 = vmatpush1.msra.mxu0 %v386
    %487 = vmatprep.subr.mxu0 0.0
    %488 = vmatpush1.msra.mxu0 %v387
    %489 = vmatprep.subr.mxu0 0.0
    %490 = vmatpush1.msra.mxu0 %v388
    %491 = vmatprep.subr.mxu0 0.0
    %492 = vmatpush1.msra.mxu0 0.0
    %493 = vmatprep.subr.mxu0 0.0
    %494 = vmatpush1.msra.mxu0 0.0
    %495 = vmatprep.subr.mxu0 0.0
    %496 = vmatpush1.msra.mxu0 0.0
    %497 = vmatprep.subr.mxu0 0.0
    %498 = vmatpush1.msra.mxu0 0.0
    %499 = vmatprep.subr.mxu0 0.0
    %500 = vmatpush1.msra.mxu0 0.0
    %501 = vmatprep.subr.mxu0 0.0
    %502 = vmatpush1.msra.mxu0 0.0
    %503 = vmatprep.subr.mxu0 0.0
    %504 = vmatpush1.msra.mxu0 0.0
    %505 = vmatprep.subr.mxu0 0.0
    %506 = vmatpush1.msra.mxu0 0.0
    %507 = vmatprep.subr.mxu0 0.0
    %508 = vmatpush1.msra.mxu0 0.0
    %509 = vmatprep.subr.mxu0 0.0
    %510 = vmatpush1.msra.mxu0 0.0
    %511 = vmatprep.subr.mxu0 0.0
    %512 = vmatpush1.msra.mxu0 0.0
    %513 = vmatprep.subr.mxu0 0.0
    %514 = vmatpush1.msra.mxu0 0.0
    %515 = vmatprep.subr.mxu0 0.0
    %516 = vmatpush1.msra.mxu0 0.0
    %517 = vmatprep.subr.mxu0 0.0
    %518 = vmatpush1.msra.mxu0 0.0
    %519 = vmatprep.subr.mxu0 0.0
    %520 = vmatpush1.msra.mxu0 0.0
    %521 = vmatprep.subr.mxu0 0.0
    %522 = vmatpush1.msra.mxu0 0.0
    %523 = vmatprep.mubr.f32.mxu0 0.0
    %524 = vmatmul.mubr.f32.gmra.mrb[0].mxu0 %v456
    %v525 = vpop.f32.mrb[0].mxu0
    %v526 = vadd.f32 0.0, %v525
    %v527 = vpop.f32.mrb[0].mxu0
    %528 = vdwg.mxu0
    %s529 = scalar_lea.vmem [#allocation7], 384
    %v530 = vld [vmem:[%s529] sm:$0xff]
    %v531 = vld [vmem:[%s529 + $0x8] sm:$0xff]
    %v532 = vld [vmem:[%s529 + $0x10] sm:$0xff]
    %v533 = vld [vmem:[%s529 + $0x18] sm:$0xff]
    %v534 = vld [vmem:[%s529 + $0x20] sm:$0xff]
    %v535 = vld [vmem:[%s529 + $0x28] sm:$0xff]
    %v536 = vld [vmem:[%s529 + $0x30] sm:$0xff]
    %v537 = vld [vmem:[%s529 + $0x38] sm:$0xff]
    %v538 = vld [vmem:[%s529 + $0x40] sm:$0xff]
    %v539 = vld [vmem:[%s529 + $0x48] sm:$0xff]
    %v540 = vld [vmem:[%s529 + $0x50] sm:$0xff]
    %v541 = vld [vmem:[%s529 + $0x58] sm:$0xff]
    %v542 = vld [vmem:[%s529 + $0x60] sm:$0xff]
    %v543 = vld [vmem:[%s529 + $0x68] sm:$0xff]
    %v544 = vld [vmem:[%s529 + $0x70] sm:$0xff]
    %v545 = vld [vmem:[%s529 + $0x78] sm:$0xff]
    %546 = vmatprep.subr.mxu0 0.0
    %547 = vmatpush1.msra.mxu0 %v526
    %548 = vmatprep.subr.mxu0 0.0
    %549 = vmatpush1.msra.mxu0 0.0
    %550 = vmatprep.subr.mxu0 0.0
    %551 = vmatpush1.msra.mxu0 0.0
    %552 = vmatprep.subr.mxu0 0.0
    %553 = vmatpush1.msra.mxu0 0.0
    %554 = vmatprep.subr.mxu0 0.0
    %555 = vmatpush1.msra.mxu0 0.0
    %556 = vmatprep.subr.mxu0 0.0
    %557 = vmatpush1.msra.mxu0 0.0
    %558 = vmatprep.subr.mxu0 0.0
    %559 = vmatpush1.msra.mxu0 0.0
    %560 = vmatprep.subr.mxu0 0.0
    %561 = vmatpush1.msra.mxu0 0.0
    %562 = vmatprep.subr.mxu0 0.0
    %563 = vmatpush1.msra.mxu0 0.0
    %564 = vmatprep.subr.mxu0 0.0
    %565 = vmatpush1.msra.mxu0 0.0
    %566 = vmatprep.subr.mxu0 0.0
    %567 = vmatpush1.msra.mxu0 0.0
    %568 = vmatprep.subr.mxu0 0.0
    %569 = vmatpush1.msra.mxu0 0.0
    %570 = vmatprep.subr.mxu0 0.0
    %571 = vmatpush1.msra.mxu0 0.0
    %572 = vmatprep.subr.mxu0 0.0
    %573 = vmatpush1.msra.mxu0 0.0
    %574 = vmatprep.subr.mxu0 0.0
    %575 = vmatpush1.msra.mxu0 0.0
    %576 = vmatprep.subr.mxu0 0.0
    %577 = vmatpush1.msra.mxu0 0.0
    %578 = vmatprep.subr.mxu0 0.0
    %579 = vmatpush1.msra.mxu0 0.0
    %580 = vmatprep.subr.mxu0 0.0
    %581 = vmatpush1.msra.mxu0 0.0
    %582 = vmatprep.subr.mxu0 0.0
    %583 = vmatpush1.msra.mxu0 0.0
    %584 = vmatprep.subr.mxu0 0.0
    %585 = vmatpush1.msra.mxu0 0.0
    %586 = vmatprep.subr.mxu0 0.0
    %587 = vmatpush1.msra.mxu0 0.0
    %588 = vmatprep.subr.mxu0 0.0
    %589 = vmatpush1.msra.mxu0 0.0
    %590 = vmatprep.subr.mxu0 0.0
    %591 = vmatpush1.msra.mxu0 0.0
    %592 = vmatprep.subr.mxu0 0.0
    %593 = vmatpush1.msra.mxu0 0.0
    %594 = vmatprep.subr.mxu0 0.0
    %595 = vmatpush1.msra.mxu0 0.0
    %596 = vmatprep.subr.mxu0 0.0
    %597 = vmatpush1.msra.mxu0 0.0
    %598 = vmatprep.subr.mxu0 0.0
    %599 = vmatpush1.msra.mxu0 0.0
    %600 = vmatprep.subr.mxu0 0.0
    %601 = vmatpush1.msra.mxu0 0.0
    %602 = vmatprep.subr.mxu0 0.0
    %603 = vmatpush1.msra.mxu0 0.0
    %604 = vmatprep.subr.mxu0 0.0
    %605 = vmatpush1.msra.mxu0 0.0
    %606 = vmatprep.subr.mxu0 0.0
    %607 = vmatpush1.msra.mxu0 0.0
    %608 = vmatprep.subr.mxu0 0.0
    %609 = vmatpush1.msra.mxu0 0.0
    %610 = vmatprep.mubr.f32.mxu0 0.0
    %611 = vmatmul.mubr.f32.gmra.mrb[0].mxu0 %v72
    %v612 = vpop.f32.mrb[0].mxu0
    %v613 = vadd.f32 0.0, %v612
    %v614 = vpop.f32.mrb[0].mxu0
    %615 = vdwg.mxu0
    %616 = vmatprep.subr.mxu0 0.0
    %617 = vmatpush1.msra.mxu0 %v530
    %618 = vmatprep.subr.mxu0 0.0
    %619 = vmatpush1.msra.mxu0 %v531
    %620 = vmatprep.subr.mxu0 0.0
    %621 = vmatpush1.msra.mxu0 %v532
    %622 = vmatprep.subr.mxu0 0.0
    %623 = vmatpush1.msra.mxu0 %v533
    %624 = vmatprep.subr.mxu0 0.0
    %625 = vmatpush1.msra.mxu0 %v534
    %626 = vmatprep.subr.mxu0 0.0
    %627 = vmatpush1.msra.mxu0 %v535
    %628 = vmatprep.subr.mxu0 0.0
    %629 = vmatpush1.msra.mxu0 %v536
    %630 = vmatprep.subr.mxu0 0.0
    %631 = vmatpush1.msra.mxu0 %v537
    %632 = vmatprep.subr.mxu0 0.0
    %633 = vmatpush1.msra.mxu0 %v538
    %634 = vmatprep.subr.mxu0 0.0
    %635 = vmatpush1.msra.mxu0 %v539
    %636 = vmatprep.subr.mxu0 0.0
    %637 = vmatpush1.msra.mxu0 %v540
    %638 = vmatprep.subr.mxu0 0.0
    %639 = vmatpush1.msra.mxu0 %v541
    %640 = vmatprep.subr.mxu0 0.0
    %641 = vmatpush1.msra.mxu0 %v542
    %642 = vmatprep.subr.mxu0 0.0
    %643 = vmatpush1.msra.mxu0 %v543
    %644 = vmatprep.subr.mxu0 0.0
    %645 = vmatpush1.msra.mxu0 %v544
    %646 = vmatprep.subr.mxu0 0.0
    %647 = vmatpush1.msra.mxu0 %v545
    %648 = vmatprep.subr.mxu0 0.0
    %649 = vmatpush1.msra.mxu0 0.0
    %650 = vmatprep.subr.mxu0 0.0
    %651 = vmatpush1.msra.mxu0 0.0
    %652 = vmatprep.subr.mxu0 0.0
    %653 = vmatpush1.msra.mxu0 0.0
    %654 = vmatprep.subr.mxu0 0.0
    %655 = vmatpush1.msra.mxu0 0.0
    %656 = vmatprep.subr.mxu0 0.0
    %657 = vmatpush1.msra.mxu0 0.0
    %658 = vmatprep.subr.mxu0 0.0
    %659 = vmatpush1.msra.mxu0 0.0
    %660 = vmatprep.subr.mxu0 0.0
    %661 = vmatpush1.msra.mxu0 0.0
    %662 = vmatprep.subr.mxu0 0.0
    %663 = vmatpush1.msra.mxu0 0.0
    %664 = vmatprep.subr.mxu0 0.0
    %665 = vmatpush1.msra.mxu0 0.0
    %666 = vmatprep.subr.mxu0 0.0
    %667 = vmatpush1.msra.mxu0 0.0
    %668 = vmatprep.subr.mxu0 0.0
    %669 = vmatpush1.msra.mxu0 0.0
    %670 = vmatprep.subr.mxu0 0.0
    %671 = vmatpush1.msra.mxu0 0.0
    %672 = vmatprep.subr.mxu0 0.0
    %673 = vmatpush1.msra.mxu0 0.0
    %674 = vmatprep.subr.mxu0 0.0
    %675 = vmatpush1.msra.mxu0 0.0
    %676 = vmatprep.subr.mxu0 0.0
    %677 = vmatpush1.msra.mxu0 0.0
    %678 = vmatprep.subr.mxu0 0.0
    %679 = vmatpush1.msra.mxu0 0.0
    %680 = vmatprep.mubr.f32.mxu0 0.0
    %681 = vmatmul.mubr.f32.gmra.mrb[0].mxu0 %v613
    %v682 = vpop.f32.mrb[0].mxu0
    %v683 = vadd.f32 0.0, %v682
    %v684 = vpop.f32.mrb[0].mxu0
    %685 = vdwg.mxu0
    %686 = vst [vmem:[#allocation8] sm:$0xff] %v683
    // Predicated region
    $region26: #{tpu_custom_call.1} parent=1 // pred_check
      _
    $region27: #{tpu_custom_call.1} parent=1 // pred_check_branch
      %688 = sbr.rel (0) target = $region29
    $region28: #{tpu_custom_call.1} parent=1 // pred_region
      %s690 = ssub.s32 128, 128
      %691 = vsyncadd [#allocation4], %s690
      %s693 = sshll.u32 [#allocation8], 4
      %s694 = int_to_ptr.vmem [resolvable:$true] %s693
      %696 = dma.vmem_to_hbm [thread:$0]  %s694, 128, %s3, [#allocation4]
    $region29: #{tpu_custom_call.1} parent=1 // pred_fallthru
      _
    // Predicated region
    $region30: #{tpu_custom_call.1} parent=1 // pred_check
      _
    $region31: #{tpu_custom_call.1} parent=1 // pred_check_branch
      %698 = sbr.rel (0) target = $region33
    $region32: #{tpu_custom_call.1} parent=1 // pred_region
      %699 = dma.done [#allocation4], 128
    $region33: #{tpu_custom_call.1} parent=1 // pred_fallthru
      _
    %700 = vsyncpa [#allocation3], 1
    %701 = vsyncpa [#allocation6], 1
    %702 = vsyncpa [#allocation4], 1

</llo_original>
